<compile_context>
chip_gen: v5e
topology: v5e:2x2
jax: 0.10.0
libtpu: 0.0.40
codegen_flags: <defaults>
</compile_context>

<pallas_src>
import jax
import jax.numpy as jnp
from jax.experimental import pallas as pl
from jax.experimental.pallas import tpu as pltpu


# ---------------------------------------------------------------------------
# Fused kernel: 2x2 max-pool + (conv3x3 + folded BN + ReLU) * 2
# One grid step processes one batch element.
# ---------------------------------------------------------------------------
def _down_fused_kernel(x00_ref, x01_ref, x10_ref, x11_ref,
                       wb1_ref, b1_ref, wb2_ref, b2_ref, o_ref):
    # x??_ref : (1, H, W*Cin)  the four 2x2 pooling phases, lane = w*Cin + c
    # wb1_ref : (3*W*Cin,  W*Cmid)  banded conv1 weights (BN scale folded in)
    # b1_ref  : (1, W*Cmid)         folded bias, tiled over w
    # wb2_ref : (3*W*Cmid, W*Cout)  banded conv2 weights
    # b2_ref  : (1, W*Cout)
    # o_ref   : (1, H, W*Cout)      lane-dense output slab

    # 2x2 max-pool, fused as an elementwise max of the four phase views.
    p = jnp.maximum(jnp.maximum(x00_ref[0], x01_ref[0]),
                    jnp.maximum(x10_ref[0], x11_ref[0]))        # (H, W*Cin)

    def conv3x3_bias_relu(z, wb, bias):
        # z: (H, W*C) with lane = w*C + c.  The 3 column taps are folded into
        # the banded weight matrix, so only the 3 row taps need im2col here:
        # one lane-concat of three row-shifted windows -> ONE MXU matmul.
        hh, wc = z.shape
        zrow = jnp.zeros((1, wc), jnp.float32)
        zp = jnp.concatenate([zrow, z, zrow], axis=0)           # (H+2, W*C)
        patches = jnp.concatenate(
            [zp[0:hh, :], zp[1:hh + 1, :], zp[2:hh + 2, :]], axis=1)  # (H, 3*W*C)
        y = jnp.dot(patches, wb, preferred_element_type=jnp.float32)  # (H, W*Cn)
        return jnp.maximum(y + bias, 0.0)

    h = conv3x3_bias_relu(p, wb1_ref[...], b1_ref[...])          # (H, W*Cmid)
    o_ref[0] = conv3x3_bias_relu(h, wb2_ref[...], b2_ref[...])   # (H, W*Cout)


# ---------------------------------------------------------------------------
# Wrapper-side parameter preprocessing (one-time constants).
# ---------------------------------------------------------------------------
def _fold_bn(conv_bias, gamma, beta, running_mean, running_var, eps=1e-5):
    s = gamma / jnp.sqrt(running_var + eps)
    return s, (conv_bias - running_mean) * s + beta


def _banded_weight(w_hwio, scale, W):
    """Fold BN scale into HWIO conv weights and expand the kw taps into a
    banded (kh*W*Cin, W*Cout) matrix so the whole 3x3 conv is one matmul.

    Row index  = dh*(W*Cin) + p*Cin + c   (p = input column)
    Col index  = w*Cout + o               (w = output column)
    Entry      = k[dh, p - w + 1, c, o] if 0 <= p - w + 1 <= 2 else 0
    (band clipping at p = -1 / p = W reproduces the zero padding in w).
    """
    kh, kw, cin, cout = w_hwio.shape
    wf = w_hwio * scale[None, None, None, :]
    # sel[dw, p, w] = 1 iff p == w + dw - 1
    sel = (jnp.arange(W)[None, :, None] ==
           (jnp.arange(kw)[:, None, None] - 1 + jnp.arange(W)[None, None, :])
           ).astype(wf.dtype)                                   # (kw, W, W)
    wb = jnp.einsum('dpw,hdio->hpiwo', sel, wf)                 # (kh,W,cin,W,cout)
    return wb.reshape(kh * W * cin, W * cout)


# ---------------------------------------------------------------------------
# Forward pass of Down (NCHW in / NCHW out; lane-dense layout internally).
# ---------------------------------------------------------------------------
def down_forward(params, x_nchw):
    x = x_nchw.astype(jnp.float32)
    N, Cin, H2, W2 = x.shape
    H, W = H2 // 2, W2 // 2
    Cmid = params["w1"].shape[-1]
    Cout = params["w2"].shape[-1]

    # The four 2x2 pooling phases in the (N, H, W*Cin) lane-dense layout
    # (pure layout work; the max itself happens inside the kernel).
    def phase(a, b):
        v = x[:, :, a::2, b::2]                                  # (N,Cin,H,W)
        return jnp.transpose(v, (0, 2, 3, 1)).reshape(N, H, W * Cin)

    x00, x01, x10, x11 = phase(0, 0), phase(0, 1), phase(1, 0), phase(1, 1)

    # Fold BN into the conv weights/bias; build banded single-matmul weights.
    s1, bb1 = _fold_bn(params["b1"], params["g1"], params["beta1"],
                       params["m1"], params["v1"])
    s2, bb2 = _fold_bn(params["b2"], params["g2"], params["beta2"],
                       params["m2"], params["v2"])
    wb1 = _banded_weight(params["w1"], s1, W)                    # (3*W*Cin,  W*Cmid)
    wb2 = _banded_weight(params["w2"], s2, W)                    # (3*W*Cmid, W*Cout)
    b1t = jnp.tile(bb1, W).reshape(1, W * Cmid)
    b2t = jnp.tile(bb2, W).reshape(1, W * Cout)

    out = pl.pallas_call(
        _down_fused_kernel,
        out_shape=jax.ShapeDtypeStruct((N, H, W * Cout), jnp.float32),
        grid=(N,),
        in_specs=[
            pl.BlockSpec((1, H, W * Cin), lambda n: (n, 0, 0)),
            pl.BlockSpec((1, H, W * Cin), lambda n: (n, 0, 0)),
            pl.BlockSpec((1, H, W * Cin), lambda n: (n, 0, 0)),
            pl.BlockSpec((1, H, W * Cin), lambda n: (n, 0, 0)),
            pl.BlockSpec((3 * W * Cin, W * Cmid), lambda n: (0, 0)),
            pl.BlockSpec((1, W * Cmid), lambda n: (0, 0)),
            pl.BlockSpec((3 * W * Cmid, W * Cout), lambda n: (0, 0)),
            pl.BlockSpec((1, W * Cout), lambda n: (0, 0)),
        ],
        out_specs=pl.BlockSpec((1, H, W * Cout), lambda n: (n, 0, 0)),
        compiler_params=pltpu.CompilerParams(
            dimension_semantics=("parallel",)),
    )(x00, x01, x10, x11, wb1, b1t, wb2, b2t)

    out = out.reshape(N, H, W, Cout)                             # NHWC
    return jnp.transpose(out, (0, 3, 1, 2))                      # NCHW


# ---------------------------------------------------------------------------
# Pure-JAX reference (reduce-window maxpool + lax.conv) for correctness check.
# ---------------------------------------------------------------------------
def _ref_down_forward(params, x_nchw):
    x = x_nchw.astype(jnp.float32)
    N, C, H2, W2 = x.shape
    pooled = jnp.max(x.reshape(N, C, H2 // 2, 2, W2 // 2, 2), axis=(3, 5))
    z = jnp.transpose(pooled, (0, 2, 3, 1))                      # NHWC

    s1, b1 = _fold_bn(params["b1"], params["g1"], params["beta1"],
                      params["m1"], params["v1"])
    s2, b2 = _fold_bn(params["b2"], params["g2"], params["beta2"],
                      params["m2"], params["v2"])

    def cbr(t, w, s, b):
        y = jax.lax.conv_general_dilated(
            t, w, window_strides=(1, 1), padding="SAME",
            dimension_numbers=("NHWC", "HWIO", "NHWC"))
        return jnp.maximum(y * s[None, None, None, :] +
                           b[None, None, None, :], 0.0)

    h = cbr(z, params["w1"], s1, b1)
    y = cbr(h, params["w2"], s2, b2)
    return jnp.transpose(y, (0, 3, 1, 2))


if __name__ == "__main__":
    # Down(in_channels=4, out_channels=8); DoubleConv default mid = out.
    in_channels, out_channels = 4, 8
    mid_channels = out_channels

    key = jax.random.PRNGKey(0)
    ks = jax.random.split(key, 13)

    params = dict(
        # conv1: in_channels -> mid_channels, 3x3 (HWIO)
        w1=0.1 * jax.random.normal(ks[0], (3, 3, in_channels, mid_channels),
                                   jnp.float32),
        b1=0.1 * jax.random.normal(ks[1], (mid_channels,), jnp.float32),
        g1=1.0 + 0.1 * jax.random.normal(ks[2], (mid_channels,), jnp.float32),
        beta1=0.1 * jax.random.normal(ks[3], (mid_channels,), jnp.float32),
        m1=0.1 * jax.random.normal(ks[4], (mid_channels,), jnp.float32),
        v1=1.0 + 0.2 * jax.random.uniform(ks[5], (mid_channels,), jnp.float32),
        # conv2: mid_channels -> out_channels, 3x3 (HWIO)
        w2=0.1 * jax.random.normal(ks[6], (3, 3, mid_channels, out_channels),
                                   jnp.float32),
        b2=0.1 * jax.random.normal(ks[7], (out_channels,), jnp.float32),
        g2=1.0 + 0.1 * jax.random.normal(ks[8], (out_channels,), jnp.float32),
        beta2=0.1 * jax.random.normal(ks[9], (out_channels,), jnp.float32),
        m2=0.1 * jax.random.normal(ks[10], (out_channels,), jnp.float32),
        v2=1.0 + 0.2 * jax.random.uniform(ks[11], (out_channels,), jnp.float32),
    )

    # Input NCHW; 32x32 pools to 16x16 so W*Cout = 128 (lane-dense output).
    x = jax.random.normal(ks[12], (2, in_channels, 32, 32), jnp.float32)

    out = jax.block_until_ready(jax.jit(down_forward)(params, x))
    assert out.shape == (2, out_channels, 16, 16), out.shape

    ref = jax.block_until_ready(_ref_down_forward(params, x))
    assert jnp.allclose(out, ref, atol=1e-2, rtol=1e-2), \
        float(jnp.max(jnp.abs(out - ref)))

    print("KERNEL_OK")
</pallas_src>

<mosaic_0001>
module attributes {stable_mosaic.version = 11 : i64} {
  func.func @_down_fused_kernel(%arg0: i32, %arg1: memref<1x16x64xf32, #tpu.memory_space<vmem>>, %arg2: memref<1x16x64xf32, #tpu.memory_space<vmem>>, %arg3: memref<1x16x64xf32, #tpu.memory_space<vmem>>, %arg4: memref<1x16x64xf32, #tpu.memory_space<vmem>>, %arg5: memref<192x128xf32, #tpu.memory_space<vmem>>, %arg6: memref<1x128xf32, #tpu.memory_space<vmem>>, %arg7: memref<384x128xf32, #tpu.memory_space<vmem>>, %arg8: memref<1x128xf32, #tpu.memory_space<vmem>>, %arg9: memref<1x16x128xf32, #tpu.memory_space<vmem>>) attributes {dimension_semantics = [#tpu.dimension_semantics<parallel>], iteration_bounds = array<i64: 2>, scalar_prefetch = 0 : i64, scratch_operands = 0 : i64, tpu.core_type = #tpu.core_type<tc>, window_params = [{transform_indices = @transform_0, window_bounds = array<i64: 1, 16, 64>}, {transform_indices = @transform_1, window_bounds = array<i64: 1, 16, 64>}, {transform_indices = @transform_2, window_bounds = array<i64: 1, 16, 64>}, {transform_indices = @transform_3, window_bounds = array<i64: 1, 16, 64>}, {pipeline_mode = #tpu.pipeline_mode<synchronous>, transform_indices = @transform_4, window_bounds = array<i64: 192, 128>}, {pipeline_mode = #tpu.pipeline_mode<synchronous>, transform_indices = @transform_5, window_bounds = array<i64: 1, 128>}, {pipeline_mode = #tpu.pipeline_mode<synchronous>, transform_indices = @transform_6, window_bounds = array<i64: 384, 128>}, {pipeline_mode = #tpu.pipeline_mode<synchronous>, transform_indices = @transform_7, window_bounds = array<i64: 1, 128>}, {transform_indices = @transform_8, window_bounds = array<i64: 1, 16, 128>}]} {
    %c0 = arith.constant 0 : index
    %c0_0 = arith.constant 0 : index
    %c0_1 = arith.constant 0 : index
    %0 = vector.load %arg1[%c0, %c0_0, %c0_1] : memref<1x16x64xf32, #tpu.memory_space<vmem>>, vector<1x16x64xf32>
    %1 = vector.shape_cast %0 : vector<1x16x64xf32> to vector<16x64xf32>
    %c0_2 = arith.constant 0 : index
    %c0_3 = arith.constant 0 : index
    %c0_4 = arith.constant 0 : index
    %2 = vector.load %arg2[%c0_2, %c0_3, %c0_4] : memref<1x16x64xf32, #tpu.memory_space<vmem>>, vector<1x16x64xf32>
    %3 = vector.shape_cast %2 : vector<1x16x64xf32> to vector<16x64xf32>
    %4 = arith.maximumf %1, %3 : vector<16x64xf32>
    %c0_5 = arith.constant 0 : index
    %c0_6 = arith.constant 0 : index
    %c0_7 = arith.constant 0 : index
    %5 = vector.load %arg3[%c0_5, %c0_6, %c0_7] : memref<1x16x64xf32, #tpu.memory_space<vmem>>, vector<1x16x64xf32>
    %6 = vector.shape_cast %5 : vector<1x16x64xf32> to vector<16x64xf32>
    %c0_8 = arith.constant 0 : index
    %c0_9 = arith.constant 0 : index
    %c0_10 = arith.constant 0 : index
    %7 = vector.load %arg4[%c0_8, %c0_9, %c0_10] : memref<1x16x64xf32, #tpu.memory_space<vmem>>, vector<1x16x64xf32>
    %8 = vector.shape_cast %7 : vector<1x16x64xf32> to vector<16x64xf32>
    %9 = arith.maximumf %6, %8 : vector<16x64xf32>
    %10 = arith.maximumf %4, %9 : vector<16x64xf32>
    %c0_11 = arith.constant 0 : index
    %c0_12 = arith.constant 0 : index
    %11 = vector.load %arg5[%c0_11, %c0_12] : memref<192x128xf32, #tpu.memory_space<vmem>>, vector<192x128xf32>
    %c0_13 = arith.constant 0 : index
    %c0_14 = arith.constant 0 : index
    %12 = vector.load %arg6[%c0_13, %c0_14] : memref<1x128xf32, #tpu.memory_space<vmem>>, vector<1x128xf32>
    %cst = arith.constant 0.000000e+00 : f32
    %13 = vector.broadcast %cst : f32 to vector<1x64xf32>
    %14 = tpu.concatenate %13, %10, %13 in 0 : vector<1x64xf32>, vector<16x64xf32>, vector<1x64xf32> -> vector<18x64xf32>
    %15 = vector.extract_strided_slice %14 {offsets = [0, 0], sizes = [16, 64], strides = [1, 1]} : vector<18x64xf32> to vector<16x64xf32>
    %16 = vector.extract_strided_slice %14 {offsets = [1, 0], sizes = [16, 64], strides = [1, 1]} : vector<18x64xf32> to vector<16x64xf32>
    %17 = vector.extract_strided_slice %14 {offsets = [2, 0], sizes = [16, 64], strides = [1, 1]} : vector<18x64xf32> to vector<16x64xf32>
    %18 = tpu.concatenate %15, %16, %17 in 1 : vector<16x64xf32>, vector<16x64xf32>, vector<16x64xf32> -> vector<16x192xf32>
    %cst_15 = arith.constant dense<0.000000e+00> : vector<16x128xf32>
    %19 = tpu.matmul %18, %11, %cst_15 {dimension_numbers = #tpu.dot_dimension_numbers<[1], [0], [0], [1], [0, 0, 1, 1], [], []>} : vector<16x192xf32>, vector<192x128xf32>, vector<16x128xf32> -> vector<16x128xf32>
    %20 = vector.broadcast %12 : vector<1x128xf32> to vector<16x128xf32>
    %21 = arith.addf %19, %20 : vector<16x128xf32>
    %cst_16 = arith.constant 0.000000e+00 : f32
    %22 = vector.broadcast %cst_16 : f32 to vector<16x128xf32>
    %23 = arith.maximumf %21, %22 : vector<16x128xf32>
    %c0_17 = arith.constant 0 : index
    %c0_18 = arith.constant 0 : index
    %24 = vector.load %arg7[%c0_17, %c0_18] : memref<384x128xf32, #tpu.memory_space<vmem>>, vector<384x128xf32>
    %c0_19 = arith.constant 0 : index
    %c0_20 = arith.constant 0 : index
    %25 = vector.load %arg8[%c0_19, %c0_20] : memref<1x128xf32, #tpu.memory_space<vmem>>, vector<1x128xf32>
    %cst_21 = arith.constant 0.000000e+00 : f32
    %26 = vector.broadcast %cst_21 : f32 to vector<1x128xf32>
    %27 = tpu.concatenate %26, %23, %26 in 0 : vector<1x128xf32>, vector<16x128xf32>, vector<1x128xf32> -> vector<18x128xf32>
    %28 = vector.extract_strided_slice %27 {offsets = [0, 0], sizes = [16, 128], strides = [1, 1]} : vector<18x128xf32> to vector<16x128xf32>
    %29 = vector.extract_strided_slice %27 {offsets = [1, 0], sizes = [16, 128], strides = [1, 1]} : vector<18x128xf32> to vector<16x128xf32>
    %30 = vector.extract_strided_slice %27 {offsets = [2, 0], sizes = [16, 128], strides = [1, 1]} : vector<18x128xf32> to vector<16x128xf32>
    %31 = tpu.concatenate %28, %29, %30 in 1 : vector<16x128xf32>, vector<16x128xf32>, vector<16x128xf32> -> vector<16x384xf32>
    %cst_22 = arith.constant dense<0.000000e+00> : vector<16x128xf32>
    %32 = tpu.matmul %31, %24, %cst_22 {dimension_numbers = #tpu.dot_dimension_numbers<[1], [0], [0], [1], [0, 0, 1, 1], [], []>} : vector<16x384xf32>, vector<384x128xf32>, vector<16x128xf32> -> vector<16x128xf32>
    %33 = vector.broadcast %25 : vector<1x128xf32> to vector<16x128xf32>
    %34 = arith.addf %32, %33 : vector<16x128xf32>
    %cst_23 = arith.constant 0.000000e+00 : f32
    %35 = vector.broadcast %cst_23 : f32 to vector<16x128xf32>
    %36 = arith.maximumf %34, %35 : vector<16x128xf32>
    %c0_24 = arith.constant 0 : index
    %c0_25 = arith.constant 0 : index
    %c0_26 = arith.constant 0 : index
    %37 = vector.load %arg9[%c0_24, %c0_25, %c0_26] : memref<1x16x128xf32, #tpu.memory_space<vmem>>, vector<1x16x128xf32>
    %38 = vector.shape_cast %37 : vector<1x16x128xf32> to vector<16x128xf32>
    %39 = vector.shape_cast %36 : vector<16x128xf32> to vector<1x16x128xf32>
    tpu.vector_store %arg9[%c0_24, %c0_25, %c0_26], %39 {strides = array<i32>} : memref<1x16x128xf32, #tpu.memory_space<vmem>>, vector<1x16x128xf32>,
    return
  }
  func.func @transform_0(%arg0: i32) -> (i32, i32, i32) {
    %c0_i32 = arith.constant 0 : i32
    %c0_i32_0 = arith.constant 0 : i32
    %c0_i32_1 = arith.constant 0 : i32
    return %arg0, %c0_i32, %c0_i32_0 : i32, i32, i32
  }
  func.func @transform_1(%arg0: i32) -> (i32, i32, i32) {
    %c0_i32 = arith.constant 0 : i32
    %c0_i32_0 = arith.constant 0 : i32
    %c0_i32_1 = arith.constant 0 : i32
    return %arg0, %c0_i32, %c0_i32_0 : i32, i32, i32
  }
  func.func @transform_2(%arg0: i32) -> (i32, i32, i32) {
    %c0_i32 = arith.constant 0 : i32
    %c0_i32_0 = arith.constant 0 : i32
    %c0_i32_1 = arith.constant 0 : i32
    return %arg0, %c0_i32, %c0_i32_0 : i32, i32, i32
  }
  func.func @transform_3(%arg0: i32) -> (i32, i32, i32) {
    %c0_i32 = arith.constant 0 : i32
    %c0_i32_0 = arith.constant 0 : i32
    %c0_i32_1 = arith.constant 0 : i32
    return %arg0, %c0_i32, %c0_i32_0 : i32, i32, i32
  }
  func.func @transform_4(%arg0: i32) -> (i32, i32) {
    %c0_i32 = arith.constant 0 : i32
    %c0_i32_0 = arith.constant 0 : i32
    %c0_i32_1 = arith.constant 0 : i32
    return %c0_i32, %c0_i32_0 : i32, i32
  }
  func.func @transform_5(%arg0: i32) -> (i32, i32) {
    %c0_i32 = arith.constant 0 : i32
    %c0_i32_0 = arith.constant 0 : i32
    %c0_i32_1 = arith.constant 0 : i32
    return %c0_i32, %c0_i32_0 : i32, i32
  }
  func.func @transform_6(%arg0: i32) -> (i32, i32) {
    %c0_i32 = arith.constant 0 : i32
    %c0_i32_0 = arith.constant 0 : i32
    %c0_i32_1 = arith.constant 0 : i32
    return %c0_i32, %c0_i32_0 : i32, i32
  }
  func.func @transform_7(%arg0: i32) -> (i32, i32) {
    %c0_i32 = arith.constant 0 : i32
    %c0_i32_0 = arith.constant 0 : i32
    %c0_i32_1 = arith.constant 0 : i32
    return %c0_i32, %c0_i32_0 : i32, i32
  }
  func.func @transform_8(%arg0: i32) -> (i32, i32, i32) {
    %c0_i32 = arith.constant 0 : i32
    %c0_i32_0 = arith.constant 0 : i32
    %c0_i32_1 = arith.constant 0 : i32
    return %arg0, %c0_i32, %c0_i32_0 : i32, i32, i32
  }
}

</mosaic_0001>

<llo_original>
// kernel: tile.13
$region0: #{tile.13}
  #allocation0 [shape = 's32[1]{0}', space=sflag, size = 0x4, scoped, tag = 'scoped memory for tile.13']
  %s0 = inlined_call_operand.vmem [shape: f32[8], index: 0, kind: input, shape index: {}]
  %s1 = inlined_call_operand.vmem [shape: f32[16,8], index: 1, kind: output, shape index: {}]
  // Predicated region
  $region2: #{tile.13} parent=0 // pred_check
    _
  $region3: #{tile.13} parent=0 // pred_check_branch
    %3 = sbr.rel (0) target = $region5
  $region4: #{tile.13} parent=0 // pred_region
    _
  $region5: #{tile.13} parent=0 // pred_fallthru
    _
  %v4 = vld [vmem:[%s0] ss:$0 sm:$0xff]
  %5 = vst [vmem:[%s1] sm:$0xff] %v4
  %s6 = scalar_lea.vmem %s1, 8
  %7 = vst [vmem:[%s6] sm:$0xff] %v4

// kernel: tile.14
$region0: #{tile.14}
  %s0 = inlined_call_operand.vmem [shape: f32[16,8], index: 0, kind: input, shape index: {}]
  %s1 = inlined_call_operand.vmem [shape: f32[1,128], index: 1, kind: output, shape index: {}]
  $region1: #{tile.14} parent=0
    #allocation0 [shape = 'u8[4096]{0}', space=vmem, size = 0x1000, scoped, tag = 'scoped mem for output reshape']
    %v2 = vld [vmem:[%s0] sm:$0x1]
    %vm3 = vcmask 64512
    %4 = vst.msk [vmem:[#allocation0] sm:$0x1] %vm3, %v2
    %s5 = scalar_lea.vmem %s0, 15
    %v6 = vld [vmem:[%s5] sm:$0x1]
    %7 = vrot.lane.b32.xlu0 %v6, 120
    %v8 = vpop.permute.xlu0 %7
    %vm9 = vcmask 1048512
    %10 = vst.msk [vmem:[#allocation0] sm:$0x1] %vm9, %v8
    %s11 = scalar_lea.vmem %s0, 14
    %v12 = vld [vmem:[%s11] sm:$0x1]
    %13 = vrot.lane.b32.xlu0 %v12, 112
    %v14 = vpop.permute.xlu0 %13
    %vm15 = vcmask 982912
    %16 = vst.msk [vmem:[#allocation0] sm:$0x1] %vm15, %v14
    %s17 = scalar_lea.vmem %s0, 13
    %v18 = vld [vmem:[%s17] sm:$0x1]
    %19 = vrot.lane.b32.xlu0 %v18, 104
    %v20 = vpop.permute.xlu0 %19
    %vm21 = vcmask 917312
    %22 = vst.msk [vmem:[#allocation0] sm:$0x1] %vm21, %v20
    %s23 = scalar_lea.vmem %s0, 12
    %v24 = vld [vmem:[%s23] sm:$0x1]
    %25 = vrot.lane.b32.xlu0 %v24, 96
    %v26 = vpop.permute.xlu0 %25
    %vm27 = vcmask 851712
    %28 = vst.msk [vmem:[#allocation0] sm:$0x1] %vm27, %v26
    %s29 = scalar_lea.vmem %s0, 11
    %v30 = vld [vmem:[%s29] sm:$0x1]
    %31 = vrot.lane.b32.xlu0 %v30, 88
    %v32 = vpop.permute.xlu0 %31
    %vm33 = vcmask 786112
    %34 = vst.msk [vmem:[#allocation0] sm:$0x1] %vm33, %v32
    %s35 = scalar_lea.vmem %s0, 10
    %v36 = vld [vmem:[%s35] sm:$0x1]
    %37 = vrot.lane.b32.xlu0 %v36, 80
    %v38 = vpop.permute.xlu0 %37
    %vm39 = vcmask 720512
    %40 = vst.msk [vmem:[#allocation0] sm:$0x1] %vm39, %v38
    %s41 = scalar_lea.vmem %s0, 9
    %v42 = vld [vmem:[%s41] sm:$0x1]
    %43 = vrot.lane.b32.xlu0 %v42, 72
    %v44 = vpop.permute.xlu0 %43
    %vm45 = vcmask 654912
    %46 = vst.msk [vmem:[#allocation0] sm:$0x1] %vm45, %v44
    %s47 = scalar_lea.vmem %s0, 8
    %v48 = vld [vmem:[%s47] sm:$0x1]
    %49 = vrot.lane.b32.xlu0 %v48, 64
    %v50 = vpop.permute.xlu0 %49
    %vm51 = vcmask 589312
    %52 = vst.msk [vmem:[#allocation0] sm:$0x1] %vm51, %v50
    %s53 = scalar_lea.vmem %s0, 7
    %v54 = vld [vmem:[%s53] sm:$0x1]
    %55 = vrot.lane.b32.xlu0 %v54, 56
    %v56 = vpop.permute.xlu0 %55
    %vm57 = vcmask 523712
    %58 = vst.msk [vmem:[#allocation0] sm:$0x1] %vm57, %v56
    %s59 = scalar_lea.vmem %s0, 6
    %v60 = vld [vmem:[%s59] sm:$0x1]
    %61 = vrot.lane.b32.xlu0 %v60, 48
    %v62 = vpop.permute.xlu0 %61
    %vm63 = vcmask 458112
    %64 = vst.msk [vmem:[#allocation0] sm:$0x1] %vm63, %v62
    %s65 = scalar_lea.vmem %s0, 5
    %v66 = vld [vmem:[%s65] sm:$0x1]
    %67 = vrot.lane.b32.xlu0 %v66, 40
    %v68 = vpop.permute.xlu0 %67
    %vm69 = vcmask 392512
    %70 = vst.msk [vmem:[#allocation0] sm:$0x1] %vm69, %v68
    %s71 = scalar_lea.vmem %s0, 4
    %v72 = vld [vmem:[%s71] sm:$0x1]
    %73 = vrot.lane.b32.xlu0 %v72, 32
    %v74 = vpop.permute.xlu0 %73
    %vm75 = vcmask 326912
    %76 = vst.msk [vmem:[#allocation0] sm:$0x1] %vm75, %v74
    %s77 = scalar_lea.vmem %s0, 3
    %v78 = vld [vmem:[%s77] sm:$0x1]
    %79 = vrot.lane.b32.xlu0 %v78, 24
    %v80 = vpop.permute.xlu0 %79
    %vm81 = vcmask 261312
    %82 = vst.msk [vmem:[#allocation0] sm:$0x1] %vm81, %v80
    %s83 = scalar_lea.vmem %s0, 2
    %v84 = vld [vmem:[%s83] sm:$0x1]
    %85 = vrot.lane.b32.xlu0 %v84, 16
    %v86 = vpop.permute.xlu0 %85
    %vm87 = vcmask 195712
    %88 = vst.msk [vmem:[#allocation0] sm:$0x1] %vm87, %v86
    %s89 = scalar_lea.vmem %s0, 1
    %v90 = vld [vmem:[%s89] sm:$0x1]
    %91 = vrot.lane.b32.xlu0 %v90, 8
    %v92 = vpop.permute.xlu0 %91
    %vm93 = vcmask 130112
    %94 = vst.msk [vmem:[#allocation0] sm:$0x1] %vm93, %v92
    %s96 = ssub.s32 2, 1
    %v97 = vld [vmem:[#allocation0] sm:%s96]
    %s99 = ssub.s32 2, 1
    %100 = vst [vmem:[%s1] sm:%s99] %v97

// kernel: down_forward.1
$region0: #{down_forward.1}
  #allocation0 [shape = 'u32[]', space=smem, size = 0x4, offset = 0x4, fixed_abs, tag = 'smem constant byte address 0x4 - core index']
  #allocation1 [shape = 'u32[72,128]{1,0:T(1,128)}', space=vmem, size = 0x9000, scoped, tag = 'internal scratch']
  %s0 = inlined_call_operand.vmem [shape: f32[2,16,64], index: 0, kind: input, shape index: {}]
  %s1 = inlined_call_operand.vmem [shape: f32[2,16,64], index: 1, kind: input, shape index: {}]
  %s2 = inlined_call_operand.vmem [shape: f32[2,16,64], index: 2, kind: input, shape index: {}]
  %s3 = inlined_call_operand.vmem [shape: f32[2,16,64], index: 3, kind: input, shape index: {}]
  %s4 = inlined_call_operand.vmem [shape: f32[192,128], index: 4, kind: input, shape index: {}]
  %s5 = inlined_call_operand.vmem [shape: f32[1,128], index: 5, kind: input, shape index: {}]
  %s6 = inlined_call_operand.vmem [shape: f32[384,128], index: 6, kind: input, shape index: {}]
  %s7 = inlined_call_operand.vmem [shape: f32[1,128], index: 7, kind: input, shape index: {}]
  %s8 = inlined_call_operand.vmem [shape: f32[2,16,128], index: 8, kind: output, shape index: {}]
  %s9 = sld [smem:[#allocation0]]
  $region65: #{down_forward.1} parent=0
    _
  %s11 = ssub.s32 1, %s9
  %s12 = scalar_select 0, %s11, %s9
  loop: start=0, step=1, limit=4
  $region2: #{down_forward.1} parent=0 // loop_pre_header
    _
  $region3: #{down_forward.1} parent=0 // loop_header
    %s14 = sphi 0, %s18
    %p15 = scmp.ge.s32.totalorder %s14, 4
    %s24 = sphi 0, %s26
    %s27 = sphi 0, %s24
    %s28 = sphi 0, %s27
    %s44 = sphi 0, %s28
    %s50 = sphi 0, %s52
    %s53 = sphi 0, %s50
    %s54 = sphi 0, %s53
    %s70 = sphi 0, %s54
    %s76 = sphi 0, %s78
    %s79 = sphi 0, %s76
    %s80 = sphi 0, %s79
    %s96 = sphi 0, %s80
    %s102 = sphi 0, %s104
    %s105 = sphi 0, %s102
    %s106 = sphi 0, %s105
    %s122 = sphi 0, %s106
    %s126 = sphi 0, %s126
    %s128 = sphi 0, %s126
    %s129 = sphi 0, %s128
    %s143 = sphi 0, %s129
    %s147 = sphi 0, %s147
    %s149 = sphi 0, %s147
    %s150 = sphi 0, %s149
    %s164 = sphi 0, %s150
    %s168 = sphi 0, %s168
    %s170 = sphi 0, %s168
    %s171 = sphi 0, %s170
    %s185 = sphi 0, %s171
    %s189 = sphi 0, %s189
    %s191 = sphi 0, %s189
    %s192 = sphi 0, %s191
    %s206 = sphi 0, %s192
    %s212 = sphi 0, %s214
    %s215 = sphi 0, %s212
    %s216 = sphi 0, %s215
    %s232 = sphi 0, %s216
  $region4: #{down_forward.1} parent=0 // loop_header_branch
    %17 = sbr.rel (%p15) target = $region8
  $region5: #{down_forward.1} parent=0 // loop_body
    %s19 = ssub.s32 %s14, 1
    %s20 = ssub.s32 %s14, 2
    %s21 = sadd.s32 %s14, 1
    %s22 = ssub.s32 %s14, %s21
    %p23 = scmp.eq.s32.totalorder %s22, 0
    %s25 = sadd.s32 %s24, 1
    %s26 = scalar_select %p23, %s24, %s25
    %p29 = pneg %p23
    %p30 = scmp.eq.s32.totalorder %s14, 1
    %p31 = por %p29, %p30
    %p32 = scmp.ne.s32.totalorder %s24, %s27
    %p33 = scmp.eq.s32.totalorder %s14, 0
    %p34 = por %p32, %p33
    %p35 = scmp.ne.s32.totalorder %s24, %s27
    %p36 = scmp.eq.s32.totalorder %s19, 1
    %p37 = por %p35, %p36
    %p38 = scmp.ne.s32.totalorder %s27, %s28
    %p39 = scmp.eq.s32.totalorder %s19, 0
    %p40 = por %p38, %p39
    %p41 = scmp.ne.s32.totalorder %s27, %s28
    %p42 = scmp.eq.s32.totalorder %s20, 1
    %p43 = por %p41, %p42
    %p45 = scmp.ne.s32.totalorder %s28, %s44
    %p46 = scmp.eq.s32.totalorder %s20, 0
    %p47 = por %p45, %p46
    %s48 = ssub.s32 %s14, %s21
    %p49 = scmp.eq.s32.totalorder %s48, 0
    %s51 = sadd.s32 %s50, 1
    %s52 = scalar_select %p49, %s50, %s51
    %p55 = pneg %p49
    %p56 = scmp.eq.s32.totalorder %s14, 1
    %p57 = por %p55, %p56
    %p58 = scmp.ne.s32.totalorder %s50, %s53
    %p59 = scmp.eq.s32.totalorder %s14, 0
    %p60 = por %p58, %p59
    %p61 = scmp.ne.s32.totalorder %s50, %s53
    %p62 = scmp.eq.s32.totalorder %s19, 1
    %p63 = por %p61, %p62
    %p64 = scmp.ne.s32.totalorder %s53, %s54
    %p65 = scmp.eq.s32.totalorder %s19, 0
    %p66 = por %p64, %p65
    %p67 = scmp.ne.s32.totalorder %s53, %s54
    %p68 = scmp.eq.s32.totalorder %s20, 1
    %p69 = por %p67, %p68
    %p71 = scmp.ne.s32.totalorder %s54, %s70
    %p72 = scmp.eq.s32.totalorder %s20, 0
    %p73 = por %p71, %p72
    %s74 = ssub.s32 %s14, %s21
    %p75 = scmp.eq.s32.totalorder %s74, 0
    %s77 = sadd.s32 %s76, 1
    %s78 = scalar_select %p75, %s76, %s77
    %p81 = pneg %p75
    %p82 = scmp.eq.s32.totalorder %s14, 1
    %p83 = por %p81, %p82
    %p84 = scmp.ne.s32.totalorder %s76, %s79
    %p85 = scmp.eq.s32.totalorder %s14, 0
    %p86 = por %p84, %p85
    %p87 = scmp.ne.s32.totalorder %s76, %s79
    %p88 = scmp.eq.s32.totalorder %s19, 1
    %p89 = por %p87, %p88
    %p90 = scmp.ne.s32.totalorder %s79, %s80
    %p91 = scmp.eq.s32.totalorder %s19, 0
    %p92 = por %p90, %p91
    %p93 = scmp.ne.s32.totalorder %s79, %s80
    %p94 = scmp.eq.s32.totalorder %s20, 1
    %p95 = por %p93, %p94
    %p97 = scmp.ne.s32.totalorder %s80, %s96
    %p98 = scmp.eq.s32.totalorder %s20, 0
    %p99 = por %p97, %p98
    %s100 = ssub.s32 %s14, %s21
    %p101 = scmp.eq.s32.totalorder %s100, 0
    %s103 = sadd.s32 %s102, 1
    %s104 = scalar_select %p101, %s102, %s103
    %p107 = pneg %p101
    %p108 = scmp.eq.s32.totalorder %s14, 1
    %p109 = por %p107, %p108
    %p110 = scmp.ne.s32.totalorder %s102, %s105
    %p111 = scmp.eq.s32.totalorder %s14, 0
    %p112 = por %p110, %p111
    %p113 = scmp.ne.s32.totalorder %s102, %s105
    %p114 = scmp.eq.s32.totalorder %s19, 1
    %p115 = por %p113, %p114
    %p116 = scmp.ne.s32.totalorder %s105, %s106
    %p117 = scmp.eq.s32.totalorder %s19, 0
    %p118 = por %p116, %p117
    %p119 = scmp.ne.s32.totalorder %s105, %s106
    %p120 = scmp.eq.s32.totalorder %s20, 1
    %p121 = por %p119, %p120
    %p123 = scmp.ne.s32.totalorder %s106, %s122
    %p124 = scmp.eq.s32.totalorder %s20, 0
    %p125 = por %p123, %p124
    %s127 = sadd.s32 %s126, 1
    %p130 = scmp.eq.s32.totalorder %s14, 1
    %p131 = scmp.ne.s32.totalorder %s126, %s128
    %p132 = scmp.eq.s32.totalorder %s14, 0
    %p133 = por %p131, %p132
    %p134 = scmp.ne.s32.totalorder %s126, %s128
    %p135 = scmp.eq.s32.totalorder %s19, 1
    %p136 = por %p134, %p135
    %p137 = scmp.ne.s32.totalorder %s128, %s129
    %p138 = scmp.eq.s32.totalorder %s19, 0
    %p139 = por %p137, %p138
    %p140 = scmp.ne.s32.totalorder %s128, %s129
    %p141 = scmp.eq.s32.totalorder %s20, 1
    %p142 = por %p140, %p141
    %p144 = scmp.ne.s32.totalorder %s129, %s143
    %p145 = scmp.eq.s32.totalorder %s20, 0
    %p146 = por %p144, %p145
    %s148 = sadd.s32 %s147, 1
    %p151 = scmp.eq.s32.totalorder %s14, 1
    %p152 = scmp.ne.s32.totalorder %s147, %s149
    %p153 = scmp.eq.s32.totalorder %s14, 0
    %p154 = por %p152, %p153
    %p155 = scmp.ne.s32.totalorder %s147, %s149
    %p156 = scmp.eq.s32.totalorder %s19, 1
    %p157 = por %p155, %p156
    %p158 = scmp.ne.s32.totalorder %s149, %s150
    %p159 = scmp.eq.s32.totalorder %s19, 0
    %p160 = por %p158, %p159
    %p161 = scmp.ne.s32.totalorder %s149, %s150
    %p162 = scmp.eq.s32.totalorder %s20, 1
    %p163 = por %p161, %p162
    %p165 = scmp.ne.s32.totalorder %s150, %s164
    %p166 = scmp.eq.s32.totalorder %s20, 0
    %p167 = por %p165, %p166
    %s169 = sadd.s32 %s168, 1
    %p172 = scmp.eq.s32.totalorder %s14, 1
    %p173 = scmp.ne.s32.totalorder %s168, %s170
    %p174 = scmp.eq.s32.totalorder %s14, 0
    %p175 = por %p173, %p174
    %p176 = scmp.ne.s32.totalorder %s168, %s170
    %p177 = scmp.eq.s32.totalorder %s19, 1
    %p178 = por %p176, %p177
    %p179 = scmp.ne.s32.totalorder %s170, %s171
    %p180 = scmp.eq.s32.totalorder %s19, 0
    %p181 = por %p179, %p180
    %p182 = scmp.ne.s32.totalorder %s170, %s171
    %p183 = scmp.eq.s32.totalorder %s20, 1
    %p184 = por %p182, %p183
    %p186 = scmp.ne.s32.totalorder %s171, %s185
    %p187 = scmp.eq.s32.totalorder %s20, 0
    %p188 = por %p186, %p187
    %s190 = sadd.s32 %s189, 1
    %p193 = scmp.eq.s32.totalorder %s14, 1
    %p194 = scmp.ne.s32.totalorder %s189, %s191
    %p195 = scmp.eq.s32.totalorder %s14, 0
    %p196 = por %p194, %p195
    %p197 = scmp.ne.s32.totalorder %s189, %s191
    %p198 = scmp.eq.s32.totalorder %s19, 1
    %p199 = por %p197, %p198
    %p200 = scmp.ne.s32.totalorder %s191, %s192
    %p201 = scmp.eq.s32.totalorder %s19, 0
    %p202 = por %p200, %p201
    %p203 = scmp.ne.s32.totalorder %s191, %s192
    %p204 = scmp.eq.s32.totalorder %s20, 1
    %p205 = por %p203, %p204
    %p207 = scmp.ne.s32.totalorder %s192, %s206
    %p208 = scmp.eq.s32.totalorder %s20, 0
    %p209 = por %p207, %p208
    %s210 = ssub.s32 %s14, %s21
    %p211 = scmp.eq.s32.totalorder %s210, 0
    %s213 = sadd.s32 %s212, 1
    %s214 = scalar_select %p211, %s212, %s213
    %p217 = pneg %p211
    %p218 = scmp.eq.s32.totalorder %s14, 1
    %p219 = por %p217, %p218
    %p220 = scmp.ne.s32.totalorder %s212, %s215
    %p221 = scmp.eq.s32.totalorder %s14, 0
    %p222 = por %p220, %p221
    %p223 = scmp.ne.s32.totalorder %s212, %s215
    %p224 = scmp.eq.s32.totalorder %s19, 1
    %p225 = por %p223, %p224
    %p226 = scmp.ne.s32.totalorder %s215, %s216
    %p227 = scmp.eq.s32.totalorder %s19, 0
    %p228 = por %p226, %p227
    %p229 = scmp.ne.s32.totalorder %s215, %s216
    %p230 = scmp.eq.s32.totalorder %s20, 1
    %p231 = por %p229, %p230
    %p233 = scmp.ne.s32.totalorder %s216, %s232
    %p234 = scmp.eq.s32.totalorder %s20, 0
    %p235 = por %p233, %p234
    %p236 = scmp.le.s32.totalorder 1, %s14
    %p237 = scmp.lt.s32.totalorder %s14, 3
    %p238 = pnand %p236, %p237
    %p239 = pneg %p238
    // Predicated region
    $region9: #{down_forward.1} parent=5 // pred_check
      _
    $region10: #{down_forward.1} parent=5 // pred_check_branch
      %241 = sbr.rel (%p238) target = $region12
    $region11: #{down_forward.1} parent=5 // pred_region
      %s242 = ssub.s32 %s14, 1
      // Predicated region
      $region13: #{down_forward.1} parent=11 // pred_check
        %p243 = pneg %p139
      $region14: #{down_forward.1} parent=11 // pred_check_branch
        %245 = sbr.rel (%p243) target = $region16
      $region15: #{down_forward.1} parent=11 // pred_region
        _
      $region16: #{down_forward.1} parent=11 // pred_fallthru
        _
      // Predicated region
      $region17: #{down_forward.1} parent=11 // pred_check
        %p246 = pneg %p160
      $region18: #{down_forward.1} parent=11 // pred_check_branch
        %248 = sbr.rel (%p246) target = $region20
      $region19: #{down_forward.1} parent=11 // pred_region
        _
      $region20: #{down_forward.1} parent=11 // pred_fallthru
        _
      // Predicated region
      $region21: #{down_forward.1} parent=11 // pred_check
        %p249 = pneg %p181
      $region22: #{down_forward.1} parent=11 // pred_check_branch
        %251 = sbr.rel (%p249) target = $region24
      $region23: #{down_forward.1} parent=11 // pred_region
        _
      $region24: #{down_forward.1} parent=11 // pred_fallthru
        _
      // Predicated region
      $region25: #{down_forward.1} parent=11 // pred_check
        %p252 = pneg %p202
      $region26: #{down_forward.1} parent=11 // pred_check_branch
        %254 = sbr.rel (%p252) target = $region28
      $region27: #{down_forward.1} parent=11 // pred_region
        _
      $region28: #{down_forward.1} parent=11 // pred_fallthru
        _
    $region12: #{down_forward.1} parent=5 // pred_fallthru
      _
    %p255 = scmp.lt.s32.totalorder %s14, 2
    // Predicated region
    $region29: #{down_forward.1} parent=5 // pred_check
      %p256 = pneg %p255
    $region30: #{down_forward.1} parent=5 // pred_check_branch
      %258 = sbr.rel (%p256) target = $region32
    $region31: #{down_forward.1} parent=5 // pred_region
      // Predicated region
      $region33: #{down_forward.1} parent=31 // pred_check
        %p259 = pneg %p34
      $region34: #{down_forward.1} parent=31 // pred_check_branch
        %261 = sbr.rel (%p259) target = $region36
      $region35: #{down_forward.1} parent=31 // pred_region
        %p262 = scmp.lt.s32.totalorder %s14, 1
        %s263 = scalar_select %p262, %s14, 1
        %s264 = smul.addr %s263, 2
        %s265 = smul.addr %s264, 8
        %s266 = scalar_lea.vmem %s0, %s265
      $region36: #{down_forward.1} parent=31 // pred_fallthru
        _
      // Predicated region
      $region37: #{down_forward.1} parent=31 // pred_check
        %p267 = pneg %p60
      $region38: #{down_forward.1} parent=31 // pred_check_branch
        %269 = sbr.rel (%p267) target = $region40
      $region39: #{down_forward.1} parent=31 // pred_region
        %p270 = scmp.lt.s32.totalorder %s14, 1
        %s271 = scalar_select %p270, %s14, 1
        %s272 = smul.addr %s271, 2
        %s273 = smul.addr %s272, 8
        %s274 = scalar_lea.vmem %s1, %s273
      $region40: #{down_forward.1} parent=31 // pred_fallthru
        _
      // Predicated region
      $region41: #{down_forward.1} parent=31 // pred_check
        %p275 = pneg %p86
      $region42: #{down_forward.1} parent=31 // pred_check_branch
        %277 = sbr.rel (%p275) target = $region44
      $region43: #{down_forward.1} parent=31 // pred_region
        %p278 = scmp.lt.s32.totalorder %s14, 1
        %s279 = scalar_select %p278, %s14, 1
        %s280 = smul.addr %s279, 2
        %s281 = smul.addr %s280, 8
        %s282 = scalar_lea.vmem %s2, %s281
      $region44: #{down_forward.1} parent=31 // pred_fallthru
        _
      // Predicated region
      $region45: #{down_forward.1} parent=31 // pred_check
        %p283 = pneg %p112
      $region46: #{down_forward.1} parent=31 // pred_check_branch
        %285 = sbr.rel (%p283) target = $region48
      $region47: #{down_forward.1} parent=31 // pred_region
        %p286 = scmp.lt.s32.totalorder %s14, 1
        %s287 = scalar_select %p286, %s14, 1
        %s288 = smul.addr %s287, 2
        %s289 = smul.addr %s288, 8
        %s290 = scalar_lea.vmem %s3, %s289
      $region48: #{down_forward.1} parent=31 // pred_fallthru
        _
    $region32: #{down_forward.1} parent=5 // pred_fallthru
      _
    %p291 = scmp.le.s32.totalorder 1, %s14
    %p292 = scmp.lt.s32.totalorder %s14, 3
    %p293 = pnand %p291, %p292
    %p294 = pneg %p293
    // Predicated region
    $region49: #{down_forward.1} parent=5 // pred_check
      _
    $region50: #{down_forward.1} parent=5 // pred_check_branch
      %296 = sbr.rel (%p293) target = $region52
    $region51: #{down_forward.1} parent=5 // pred_region
      %s297 = ssub.s32 %s14, 1
      %p298 = scmp.lt.s32.totalorder %s19, 1
      %s299 = scalar_select %p298, %s19, 1
      %s300 = smul.addr %s299, 2
      %s301 = smul.addr %s300, 8
      %s302 = scalar_lea.vmem %s0, %s301
      %p303 = pneg %p40
      %p304 = pneg %p37
      %p305 = scmp.lt.s32.totalorder %s19, 1
      %s306 = scalar_select %p305, %s19, 1
      %s307 = smul.addr %s306, 2
      %s308 = smul.addr %s307, 8
      %s309 = scalar_lea.vmem %s1, %s308
      %p310 = pneg %p66
      %p311 = pneg %p63
      %p312 = scmp.lt.s32.totalorder %s19, 1
      %s313 = scalar_select %p312, %s19, 1
      %s314 = smul.addr %s313, 2
      %s315 = smul.addr %s314, 8
      %s316 = scalar_lea.vmem %s2, %s315
      %p317 = pneg %p92
      %p318 = pneg %p89
      %p319 = scmp.lt.s32.totalorder %s19, 1
      %s320 = scalar_select %p319, %s19, 1
      %s321 = smul.addr %s320, 2
      %s322 = smul.addr %s321, 8
      %s323 = scalar_lea.vmem %s3, %s322
      %p324 = pneg %p118
      %p325 = pneg %p115
      %p326 = pneg %p139
      %p327 = pneg %p136
      %p328 = pneg %p160
      %p329 = pneg %p157
      %p330 = pneg %p181
      %p331 = pneg %p178
      %p332 = pneg %p202
      %p333 = pneg %p199
      %p334 = pneg %p228
      %p335 = pneg %p225
      %p336 = scmp.lt.s32.totalorder %s19, 1
      %s337 = scalar_select %p336, %s19, 1
      %s338 = smul.addr %s337, 2
      %s339 = smul.addr %s338, 8
      %s340 = scalar_lea.vmem %s8, %s339
      %p341 = scmp.lt.s32.totalorder %s19, 1
      %s342 = scalar_select %p341, %s19, 1
      %s343 = smul.addr %s342, 2
      %s344 = smul.addr %s343, 8
      %s345 = scalar_lea.vmem %s0, %s344
      %p346 = scmp.lt.s32.totalorder %s19, 1
      %s347 = scalar_select %p346, %s19, 1
      %s348 = smul.addr %s347, 2
      %s349 = smul.addr %s348, 8
      %s350 = scalar_lea.vmem %s1, %s349
      %p351 = scmp.lt.s32.totalorder %s19, 1
      %s352 = scalar_select %p351, %s19, 1
      %s353 = smul.addr %s352, 2
      %s354 = smul.addr %s353, 8
      %s355 = scalar_lea.vmem %s2, %s354
      %p356 = scmp.lt.s32.totalorder %s19, 1
      %s357 = scalar_select %p356, %s19, 1
      %s358 = smul.addr %s357, 2
      %s359 = smul.addr %s358, 8
      %s360 = scalar_lea.vmem %s3, %s359
      %p361 = scmp.lt.s32.totalorder %s19, 1
      %s362 = scalar_select %p361, %s19, 1
      %s363 = smul.addr %s362, 2
      %s364 = smul.addr %s363, 8
      %s365 = scalar_lea.vmem %s8, %s364
      %v366 = vld [vmem:[%s345] sm:$0xff]
      %v367 = vld [vmem:[%s345 + $0x8] sm:$0xff]
      %v368 = vld [vmem:[%s350] sm:$0xff]
      %v369 = vld [vmem:[%s350 + $0x8] sm:$0xff]
      %v370 = vmax.f32 %v366, %v368
      %v371 = vmax.f32 %v367, %v369
      %v372 = vld [vmem:[%s355] sm:$0xff]
      %v373 = vld [vmem:[%s355 + $0x8] sm:$0xff]
      %v374 = vld [vmem:[%s360] sm:$0xff]
      %v375 = vld [vmem:[%s360 + $0x8] sm:$0xff]
      %v376 = vmax.f32 %v372, %v374
      %v377 = vmax.f32 %v373, %v375
      %v378 = vmax.f32 %v370, %v376
      %v379 = vmax.f32 %v371, %v377
      %v380 = vld [vmem:[%s4] sm:$0xff]
      %v381 = vld [vmem:[%s4 + $0x8] sm:$0xff]
      %v382 = vld [vmem:[%s4 + $0x10] sm:$0xff]
      %v383 = vld [vmem:[%s4 + $0x18] sm:$0xff]
      %v384 = vld [vmem:[%s4 + $0x20] sm:$0xff]
      %v385 = vld [vmem:[%s4 + $0x28] sm:$0xff]
      %v386 = vld [vmem:[%s4 + $0x30] sm:$0xff]
      %v387 = vld [vmem:[%s4 + $0x38] sm:$0xff]
      %v388 = vld [vmem:[%s4 + $0x40] sm:$0xff]
      %v389 = vld [vmem:[%s4 + $0x48] sm:$0xff]
      %v390 = vld [vmem:[%s4 + $0x50] sm:$0xff]
      %v391 = vld [vmem:[%s4 + $0x58] sm:$0xff]
      %v392 = vld [vmem:[%s4 + $0x60] sm:$0xff]
      %v393 = vld [vmem:[%s4 + $0x68] sm:$0xff]
      %v394 = vld [vmem:[%s4 + $0x70] sm:$0xff]
      %v395 = vld [vmem:[%s4 + $0x78] sm:$0xff]
      %v396 = vld [vmem:[%s4 + $0x80] sm:$0xff]
      %v397 = vld [vmem:[%s4 + $0x88] sm:$0xff]
      %v398 = vld [vmem:[%s4 + $0x90] sm:$0xff]
      %v399 = vld [vmem:[%s4 + $0x98] sm:$0xff]
      %v400 = vld [vmem:[%s4 + $0xa0] sm:$0xff]
      %v401 = vld [vmem:[%s4 + $0xa8] sm:$0xff]
      %v402 = vld [vmem:[%s4 + $0xb0] sm:$0xff]
      %v403 = vld [vmem:[%s4 + $0xb8] sm:$0xff]
      %v404 = vld [vmem:[%s5] sm:$0x1]
      %vm407 = vcmask 1040384
      %v408 = vrot.slane %v378, 7
      %v409 = vrot.slane %v379, 7
      %v410 = vsel %vm407, %v408, %v409
      %v414 = vsel %vm407, 0.0, %v408
      %v415 = vsel %vm407, %v409, 0.0
      %vm418 = vcmask 1046528
      %v419 = vrot.slane %v414, 1
      %v420 = vrot.slane %v410, 1
      %v421 = vsel %vm418, %v419, %v420
      %v422 = vrot.slane %v415, 1
      %v423 = vsel %vm418, %v420, %v422
      %424 = vrot.lane.b32.xlu0 %v421, 64
      %v425 = vpop.permute.xlu0 %424
      %426 = vrot.lane.b32.xlu0 %v423, 64
      %v427 = vpop.permute.xlu0 %426
      %vm430 = vcmask 1045504
      %v431 = vrot.slane %v414, 2
      %v432 = vrot.slane %v410, 2
      %v433 = vsel %vm430, %v431, %v432
      %v434 = vrot.slane %v415, 2
      %v435 = vsel %vm430, %v432, %v434
      %vm436 = vcmask 523264
      %v437 = vsel %vm436, %v414, %v425
      %v438 = vsel %vm436, %v410, %v427
      %v440 = vperm.slane %v404, 0
      %v442 = vsel %vm436, %v433, 0
      %v444 = vsel %vm436, %v435, 0
      %446 = vmatpush.msra.mxu0 %v395
      %447 = vmatpush.msra.mxu0 %v394
      %448 = vmatpush.msra.mxu0 %v393
      %449 = vmatpush.msra.mxu0 %v392
      %450 = vmatpush.msra.mxu0 %v391
      %451 = vmatpush.msra.mxu0 %v390
      %452 = vmatpush.msra.mxu0 %v389
      %453 = vmatpush.msra.mxu0 %v388
      %454 = vmatpush.msra.mxu0 %v387
      %455 = vmatpush.msra.mxu0 %v386
      %456 = vmatpush.msra.mxu0 %v385
      %457 = vmatpush.msra.mxu0 %v384
      %458 = vmatpush.msra.mxu0 %v383
      %459 = vmatpush.msra.mxu0 %v382
      %460 = vmatpush.msra.mxu0 %v381
      %461 = vmatpush.msra.mxu0 %v380
      %462 = vmatmul.f32.gmra.mxu0 %v437
      %v463 = vpop.f32.mrf.mxu0
      %v464 = vadd.f32 %v440, %v463
      %465 = vmatmul.f32.gmra.mxu0 %v438
      %v466 = vpop.f32.mrf.mxu0
      %v467 = vadd.f32 %v440, %v466
      %468 = vdwg.mxu0
      %469 = vmatpush.msra.mxu0 0.0
      %470 = vmatpush.msra.mxu0 0.0
      %471 = vmatpush.msra.mxu0 0.0
      %472 = vmatpush.msra.mxu0 0.0
      %473 = vmatpush.msra.mxu0 0.0
      %474 = vmatpush.msra.mxu0 0.0
      %475 = vmatpush.msra.mxu0 0.0
      %476 = vmatpush.msra.mxu0 0.0
      %477 = vmatpush.msra.mxu0 %v403
      %478 = vmatpush.msra.mxu0 %v402
      %479 = vmatpush.msra.mxu0 %v401
      %480 = vmatpush.msra.mxu0 %v400
      %481 = vmatpush.msra.mxu0 %v399
      %482 = vmatpush.msra.mxu0 %v398
      %483 = vmatpush.msra.mxu0 %v397
      %484 = vmatpush.msra.mxu0 %v396
      %485 = vmatmul.f32.gmra.mxu0 %v442
      %v486 = vpop.f32.mrf.mxu0
      %v487 = vadd.f32 %v464, %v486
      %488 = vmatmul.f32.gmra.mxu0 %v444
      %v489 = vpop.f32.mrf.mxu0
      %v490 = vadd.f32 %v467, %v489
      %491 = vdwg.mxu0
      %v492 = vmax.f32 %v487, 0.0
      %v493 = vmax.f32 %v490, 0.0
      %v494 = vld [vmem:[%s6] sm:$0xff]
      %v495 = vld [vmem:[%s6 + $0x8] sm:$0xff]
      %v496 = vld [vmem:[%s6 + $0x10] sm:$0xff]
      %v497 = vld [vmem:[%s6 + $0x18] sm:$0xff]
      %v498 = vld [vmem:[%s6 + $0x20] sm:$0xff]
      %v499 = vld [vmem:[%s6 + $0x28] sm:$0xff]
      %v500 = vld [vmem:[%s6 + $0x30] sm:$0xff]
      %v501 = vld [vmem:[%s6 + $0x38] sm:$0xff]
      %v502 = vld [vmem:[%s6 + $0x40] sm:$0xff]
      %v503 = vld [vmem:[%s6 + $0x48] sm:$0xff]
      %v504 = vld [vmem:[%s6 + $0x50] sm:$0xff]
      %v505 = vld [vmem:[%s6 + $0x58] sm:$0xff]
      %v506 = vld [vmem:[%s6 + $0x60] sm:$0xff]
      %v507 = vld [vmem:[%s6 + $0x68] sm:$0xff]
      %v508 = vld [vmem:[%s6 + $0x70] sm:$0xff]
      %v509 = vld [vmem:[%s6 + $0x78] sm:$0xff]
      %v510 = vld [vmem:[%s6 + $0x80] sm:$0xff]
      %v511 = vld [vmem:[%s6 + $0x88] sm:$0xff]
      %v512 = vld [vmem:[%s6 + $0x90] sm:$0xff]
      %v513 = vld [vmem:[%s6 + $0x98] sm:$0xff]
      %v514 = vld [vmem:[%s6 + $0xa0] sm:$0xff]
      %v515 = vld [vmem:[%s6 + $0xa8] sm:$0xff]
      %v516 = vld [vmem:[%s6 + $0xb0] sm:$0xff]
      %v517 = vld [vmem:[%s6 + $0xb8] sm:$0xff]
      %v518 = vld [vmem:[%s6 + $0xc0] sm:$0xff]
      %v519 = vld [vmem:[%s6 + $0xc8] sm:$0xff]
      %v520 = vld [vmem:[%s6 + $0xd0] sm:$0xff]
      %v521 = vld [vmem:[%s6 + $0xd8] sm:$0xff]
      %v522 = vld [vmem:[%s6 + $0xe0] sm:$0xff]
      %v523 = vld [vmem:[%s6 + $0xe8] sm:$0xff]
      %v524 = vld [vmem:[%s6 + $0xf0] sm:$0xff]
      %v525 = vld [vmem:[%s6 + $0xf8] sm:$0xff]
      %v526 = vld [vmem:[%s6 + $0x100] sm:$0xff]
      %v527 = vld [vmem:[%s6 + $0x108] sm:$0xff]
      %v528 = vld [vmem:[%s6 + $0x110] sm:$0xff]
      %v529 = vld [vmem:[%s6 + $0x118] sm:$0xff]
      %v530 = vld [vmem:[%s6 + $0x120] sm:$0xff]
      %v531 = vld [vmem:[%s6 + $0x128] sm:$0xff]
      %v532 = vld [vmem:[%s6 + $0x130] sm:$0xff]
      %v533 = vld [vmem:[%s6 + $0x138] sm:$0xff]
      %v534 = vld [vmem:[%s6 + $0x140] sm:$0xff]
      %v535 = vld [vmem:[%s6 + $0x148] sm:$0xff]
      %v536 = vld [vmem:[%s6 + $0x150] sm:$0xff]
      %v537 = vld [vmem:[%s6 + $0x158] sm:$0xff]
      %v538 = vld [vmem:[%s6 + $0x160] sm:$0xff]
      %v539 = vld [vmem:[%s6 + $0x168] sm:$0xff]
      %v540 = vld [vmem:[%s6 + $0x170] sm:$0xff]
      %v541 = vld [vmem:[%s6 + $0x178] sm:$0xff]
      %v542 = vld [vmem:[%s7] sm:$0x1]
      %v545 = vrot.slane %v492, 7
      %v546 = vrot.slane %v493, 7
      %v547 = vsel %vm407, %v545, %v546
      %v551 = vsel %vm407, 0.0, %v545
      %v552 = vsel %vm407, %v546, 0.0
      %v555 = vrot.slane %v551, 1
      %v556 = vrot.slane %v547, 1
      %v557 = vsel %vm418, %v555, %v556
      %v558 = vrot.slane %v552, 1
      %v559 = vsel %vm418, %v556, %v558
      %v562 = vrot.slane %v551, 2
      %v563 = vrot.slane %v547, 2
      %v564 = vsel %vm430, %v562, %v563
      %v565 = vrot.slane %v552, 2
      %v566 = vsel %vm430, %v563, %v565
      %v570 = vperm.slane %v542, 0
      %572 = vmatpush.msra.mxu0 %v509
      %573 = vmatpush.msra.mxu0 %v508
      %574 = vmatpush.msra.mxu0 %v507
      %575 = vmatpush.msra.mxu0 %v506
      %576 = vmatpush.msra.mxu0 %v505
      %577 = vmatpush.msra.mxu0 %v504
      %578 = vmatpush.msra.mxu0 %v503
      %579 = vmatpush.msra.mxu0 %v502
      %580 = vmatpush.msra.mxu0 %v501
      %581 = vmatpush.msra.mxu0 %v500
      %582 = vmatpush.msra.mxu0 %v499
      %583 = vmatpush.msra.mxu0 %v498
      %584 = vmatpush.msra.mxu0 %v497
      %585 = vmatpush.msra.mxu0 %v496
      %586 = vmatpush.msra.mxu0 %v495
      %587 = vmatpush.msra.mxu0 %v494
      %588 = vmatmul.f32.gmra.mxu0 %v551
      %v589 = vpop.f32.mrf.mxu0
      %v590 = vadd.f32 %v570, %v589
      %591 = vmatmul.f32.gmra.mxu0 %v547
      %v592 = vpop.f32.mrf.mxu0
      %v593 = vadd.f32 %v570, %v592
      %594 = vdwg.mxu0
      %595 = vmatpush.msra.mxu0 %v525
      %596 = vmatpush.msra.mxu0 %v524
      %597 = vmatpush.msra.mxu0 %v523
      %598 = vmatpush.msra.mxu0 %v522
      %599 = vmatpush.msra.mxu0 %v521
      %600 = vmatpush.msra.mxu0 %v520
      %601 = vmatpush.msra.mxu0 %v519
      %602 = vmatpush.msra.mxu0 %v518
      %603 = vmatpush.msra.mxu0 %v517
      %604 = vmatpush.msra.mxu0 %v516
      %605 = vmatpush.msra.mxu0 %v515
      %606 = vmatpush.msra.mxu0 %v514
      %607 = vmatpush.msra.mxu0 %v513
      %608 = vmatpush.msra.mxu0 %v512
      %609 = vmatpush.msra.mxu0 %v511
      %610 = vmatpush.msra.mxu0 %v510
      %611 = vmatmul.f32.gmra.mxu0 %v557
      %v612 = vpop.f32.mrf.mxu0
      %v613 = vadd.f32 %v590, %v612
      %614 = vmatmul.f32.gmra.mxu0 %v559
      %v615 = vpop.f32.mrf.mxu0
      %v616 = vadd.f32 %v593, %v615
      %617 = vdwg.mxu0
      %618 = vmatpush.msra.mxu0 %v541
      %619 = vmatpush.msra.mxu0 %v540
      %620 = vmatpush.msra.mxu0 %v539
      %621 = vmatpush.msra.mxu0 %v538
      %622 = vmatpush.msra.mxu0 %v537
      %623 = vmatpush.msra.mxu0 %v536
      %624 = vmatpush.msra.mxu0 %v535
      %625 = vmatpush.msra.mxu0 %v534
      %626 = vmatpush.msra.mxu0 %v533
      %627 = vmatpush.msra.mxu0 %v532
      %628 = vmatpush.msra.mxu0 %v531
      %629 = vmatpush.msra.mxu0 %v530
      %630 = vmatpush.msra.mxu0 %v529
      %631 = vmatpush.msra.mxu0 %v528
      %632 = vmatpush.msra.mxu0 %v527
      %633 = vmatpush.msra.mxu0 %v526
      %634 = vmatmul.f32.gmra.mxu0 %v564
      %v635 = vpop.f32.mrf.mxu0
      %v636 = vadd.f32 %v613, %v635
      %637 = vmatmul.f32.gmra.mxu0 %v566
      %v638 = vpop.f32.mrf.mxu0
      %v639 = vadd.f32 %v616, %v638
      %640 = vdwg.mxu0
      %v641 = vmax.f32 %v636, 0.0
      %v642 = vmax.f32 %v639, 0.0
      %643 = vst [vmem:[%s365] sm:$0xff] %v641
      %644 = vst [vmem:[%s365 + $0x8] sm:$0xff] %v642
      %p645 = scmp.lt.s32.totalorder %s19, 1
      %s646 = scalar_select %p645, %s19, 1
      %s647 = smul.addr %s646, 2
      %s648 = smul.addr %s647, 8
      %s649 = scalar_lea.vmem %s8, %s648
      // Predicated region
      $region53: #{down_forward.1} parent=51 // pred_check
        %p650 = pneg %p225
      $region54: #{down_forward.1} parent=51 // pred_check_branch
        %652 = sbr.rel (%p650) target = $region56
      $region55: #{down_forward.1} parent=51 // pred_region
        _
      $region56: #{down_forward.1} parent=51 // pred_fallthru
        _
    $region52: #{down_forward.1} parent=5 // pred_fallthru
      _
    %p653 = scmp.le.s32.totalorder 2, %s14
    // Predicated region
    $region57: #{down_forward.1} parent=5 // pred_check
      %p654 = pneg %p653
    $region58: #{down_forward.1} parent=5 // pred_check_branch
      %656 = sbr.rel (%p654) target = $region60
    $region59: #{down_forward.1} parent=5 // pred_region
      %s657 = ssub.s32 %s14, 2
      // Predicated region
      $region61: #{down_forward.1} parent=59 // pred_check
        %p658 = pneg %p231
      $region62: #{down_forward.1} parent=59 // pred_check_branch
        %660 = sbr.rel (%p658) target = $region64
      $region63: #{down_forward.1} parent=59 // pred_region
        %p661 = scmp.lt.s32.totalorder %s20, 1
        %s662 = scalar_select %p661, %s20, 1
        %s663 = smul.addr %s662, 2
        %s664 = smul.addr %s663, 8
        %s665 = scalar_lea.vmem %s8, %s664
      $region64: #{down_forward.1} parent=59 // pred_fallthru
        _
    $region60: #{down_forward.1} parent=5 // pred_fallthru
      _
  $region6: #{down_forward.1} parent=0 // loop_footer
    %s18 = sadd.s32 1, %s14
  $region7: #{down_forward.1} parent=0 // loop_footer_branch
    %13 = sbr.rel target = $region3
  $region8: #{down_forward.1} parent=0 // loop_exit
    _

</llo_original>
